<compile_context>
chip_gen: v7x
topology: tpu7x:2x2x1
jax: 0.10.0
libtpu: 0.0.40
codegen_flags: <defaults>
</compile_context>

<pallas_src>
import functools

import jax
import jax.numpy as jnp
from jax.experimental import pallas as pl
from jax.experimental.pallas import tpu as pltpu


# ---------------------------------------------------------------------------
# Fused multi-layer conv kernel
# ---------------------------------------------------------------------------
def _fused_cnn_kernel(x_ref, w_ref, b_ref, o_ref, a_ref, *,
                      depth, seq, hidden, cmax, use_bf16):
    # x_ref: (TB, L, Cmax)        input tile, channels zero-padded to Cmax
    # w_ref: (depth, 3*Cmax, H)   stacked per-layer weights (tap-major rows)
    # b_ref: (depth, 1, H)        stacked per-layer biases
    # o_ref: (TB, L, H)           output tile
    # a_ref: (TB, L+2, Cmax) f32  VMEM activation scratch with sequence halo
    tb = x_ref.shape[0]
    L = seq
    in_dtype = jnp.bfloat16 if use_bf16 else jnp.float32

    # Stage input into the haloed activation buffer; halo rows stay zero
    # (zeroed every step: scratch is per-core, so do NOT gate on program_id).
    zero_row = jnp.zeros((tb, 1, cmax), jnp.float32)
    a_ref[:, 0:1, :] = zero_row
    a_ref[:, L + 1:L + 2, :] = zero_row
    a_ref[:, 1:L + 1, :] = x_ref[...].astype(jnp.float32)

    for layer in range(depth):                       # static unroll, depth is small
        # Shifted sequence views; the halo rows supply the zero padding, so no
        # jnp.pad / extra materialized copies are needed.
        a_prev = a_ref[:, 0:L, :].reshape(tb * L, cmax)        # x[t-1]
        a_curr = a_ref[:, 1:L + 1, :].reshape(tb * L, cmax)    # x[t]
        a_next = a_ref[:, 2:L + 2, :].reshape(tb * L, cmax)    # x[t+1]
        # im2col: fold the 3 taps into one MXU matmul with K = 3*Cmax.
        im2col = jnp.concatenate([a_prev, a_curr, a_next], axis=-1)
        y = jnp.dot(im2col.astype(in_dtype),
                    w_ref[layer].astype(in_dtype),
                    preferred_element_type=jnp.float32)        # (TB*L, H)
        y = jnp.maximum(y + b_ref[layer].astype(jnp.float32), 0.0)
        # TODO(synk): F.dropout(training=True) is stochastic; inference
        # (identity) semantics only.
        if layer == depth - 1:
            o_ref[...] = y.reshape(tb, L, hidden).astype(o_ref.dtype)
        else:
            y3 = y.reshape(tb, L, hidden)
            if hidden == cmax:
                a_ref[:, 1:L + 1, :] = y3
            else:
                # n_in > hidden: activation channels >= hidden multiply zero
                # weight rows, so only the first `hidden` channels are written.
                a_ref[:, 1:L + 1, 0:hidden] = y3


def _pick_batch_tile(batch, seq, target_rows=1024):
    """Batch elements per grid step, aiming for >=~512-1024 matmul rows."""
    tb = max(1, min(batch, target_rows // max(seq, 1)))
    while batch % tb:
        tb -= 1
    return tb


# ---------------------------------------------------------------------------
# MultiLayerCNN wrapper
# ---------------------------------------------------------------------------
def init_params(key, n_in, hidden_dim, depth):
    """PyTorch Conv2d weight shape is (H, 1, 3, Cin); store each layer as
    w: (3, Cin, H), b: (1, H)."""
    weights, biases = [], []
    c_in = n_in
    for _ in range(depth):
        key, kw, kb = jax.random.split(key, 3)
        fan_in = 3 * c_in
        bound = 1.0 / jnp.sqrt(fan_in)
        w_torch = jax.random.uniform(kw, (hidden_dim, 1, 3, c_in),
                                     jnp.float32, -bound, bound)
        b = jax.random.uniform(kb, (hidden_dim,), jnp.float32, -bound, bound)
        w = jnp.transpose(w_torch[:, 0, :, :], (1, 2, 0))   # (3, Cin, H)
        weights.append(w)
        biases.append(b.reshape(1, hidden_dim))
        c_in = hidden_dim
    return weights, biases


@functools.partial(jax.jit, static_argnames=("n_in", "use_bf16"))
def multilayer_cnn_forward(x, weights, biases, n_in, use_bf16=False):
    """Mirrors MultiLayerCNN.forward (inference: dropout == identity).

    x: (B, L, n_in); weights[i]: (3, Cin_i, H); biases[i]: (1, H).
    Returns (B, 1, L, H), matching the PyTorch module's output layout.
    """
    B = x.shape[0]
    h = x.reshape(B, -1, n_in).astype(jnp.float32)     # (B, L, n_in)
    L = h.shape[1]
    depth = len(weights)
    H = weights[0].shape[-1]
    cmax = max(n_in, H)

    # Stack per-layer weights into one VMEM-resident array; pad every layer's
    # channel (K) dimension to Cmax with zero rows so one code path serves the
    # n_in->H layer and the H->H layers.  (Tiny, one-time host-side XLA ops.)
    w_rows = []
    for w in weights:                                  # (3, Cin, H)
        cin = w.shape[1]
        wp = jnp.pad(w, ((0, 0), (0, cmax - cin), (0, 0)))
        w_rows.append(wp.reshape(3 * cmax, H))
    w_all = jnp.stack(w_rows)                          # (depth, 3*Cmax, H)
    b_all = jnp.stack(biases)                          # (depth, 1, H)
    if use_bf16:
        w_all = w_all.astype(jnp.bfloat16)             # halve weight HBM bytes

    if cmax > n_in:
        h = jnp.pad(h, ((0, 0), (0, 0), (0, cmax - n_in)))

    tb = _pick_batch_tile(B, L)
    grid = (B // tb,)

    kernel = functools.partial(_fused_cnn_kernel, depth=depth, seq=L,
                               hidden=H, cmax=cmax, use_bf16=use_bf16)
    out = pl.pallas_call(
        kernel,
        out_shape=jax.ShapeDtypeStruct((B, L, H), jnp.float32),
        grid_spec=pltpu.PrefetchScalarGridSpec(
            num_scalar_prefetch=0,
            grid=grid,
            in_specs=[
                pl.BlockSpec((tb, L, cmax), lambda i: (i, 0, 0)),
                pl.BlockSpec((depth, 3 * cmax, H), lambda i: (0, 0, 0)),
                pl.BlockSpec((depth, 1, H), lambda i: (0, 0, 0)),
            ],
            out_specs=pl.BlockSpec((tb, L, H), lambda i: (i, 0, 0)),
            scratch_shapes=[pltpu.VMEM((tb, L + 2, cmax), jnp.float32)],
        ),
        compiler_params=pltpu.CompilerParams(
            dimension_semantics=("parallel",)),
    )(h, w_all, b_all)

    # PyTorch returns (B, 1, L, H) after the final permute(0, 3, 2, 1).
    return out.reshape(B, 1, L, H)


# ---------------------------------------------------------------------------
# Pure-JAX reference for correctness checking
# ---------------------------------------------------------------------------
def _ref_forward(x, weights, biases, n_in):
    B = x.shape[0]
    h = x.reshape(B, -1, n_in)
    for w, b in zip(weights, biases):
        hp = jnp.pad(h, ((0, 0), (1, 1), (0, 0)))
        y = (jnp.einsum("blc,ch->blh", hp[:, :-2], w[0]) +
             jnp.einsum("blc,ch->blh", hp[:, 1:-1], w[1]) +
             jnp.einsum("blc,ch->blh", hp[:, 2:], w[2]) + b)
        h = jax.nn.relu(y)
    return h.reshape(B, 1, h.shape[1], h.shape[2])


if __name__ == "__main__":
    B, L, n_in, hidden_dim, depth = 2, 16, 8, 32, 2

    key = jax.random.PRNGKey(0)
    key, kx = jax.random.split(key)
    x = jax.random.normal(kx, (B, L, n_in), jnp.float32)

    weights, biases = init_params(key, n_in, hidden_dim, depth)
    ref = _ref_forward(x, weights, biases, n_in)

    # f32 path (exact check)
    out = multilayer_cnn_forward(x, weights, biases, n_in)
    out = jax.block_until_ready(out)
    assert out.shape == (B, 1, L, hidden_dim), out.shape
    assert jnp.allclose(out, ref, atol=1e-4, rtol=1e-4), "f32 mismatch vs reference"

    # bf16-matmul path (v6e/v7x lever; f32 epilogue keeps it v5e-safe)
    out_bf16 = multilayer_cnn_forward(x, weights, biases, n_in, use_bf16=True)
    out_bf16 = jax.block_until_ready(out_bf16)
    assert out_bf16.shape == (B, 1, L, hidden_dim), out_bf16.shape
    assert jnp.allclose(out_bf16, ref, atol=5e-2, rtol=5e-2), "bf16 mismatch vs reference"

    print("KERNEL_OK")
</pallas_src>

<mosaic_0001>
module attributes {stable_mosaic.version = 11 : i64} {
  func.func @_fused_cnn_kernel(%arg0: i32, %arg1: memref<2x16x32xf32, #tpu.memory_space<vmem>>, %arg2: memref<2x96x32xf32, #tpu.memory_space<vmem>>, %arg3: memref<2x1x32xf32, #tpu.memory_space<vmem>>, %arg4: memref<2x16x32xf32, #tpu.memory_space<vmem>>, %arg5: memref<2x18x32xf32, #tpu.memory_space<vmem>>) attributes {dimension_semantics = [#tpu.dimension_semantics<parallel>], iteration_bounds = array<i64: 1>, scalar_prefetch = 0 : i64, scratch_operands = 1 : i64, tpu.core_type = #tpu.core_type<tc>, window_params = [{transform_indices = @transform_0, window_bounds = array<i64: 2, 16, 32>}, {pipeline_mode = #tpu.pipeline_mode<synchronous>, transform_indices = @transform_1, window_bounds = array<i64: 2, 96, 32>}, {pipeline_mode = #tpu.pipeline_mode<synchronous>, transform_indices = @transform_2, window_bounds = array<i64: 2, 1, 32>}, {transform_indices = @transform_3, window_bounds = array<i64: 2, 16, 32>}]} {
    %cst = arith.constant 0.000000e+00 : f32
    %0 = vector.broadcast %cst : f32 to vector<2x1x32xf32>
    %c0 = arith.constant 0 : index
    %c0_0 = arith.constant 0 : index
    %c0_1 = arith.constant 0 : index
    %1 = vector.load %arg5[%c0, %c0_0, %c0_1] : memref<2x18x32xf32, #tpu.memory_space<vmem>>, vector<2x1x32xf32>
    tpu.vector_store %arg5[%c0, %c0_0, %c0_1], %0 {strides = array<i32>} : memref<2x18x32xf32, #tpu.memory_space<vmem>>, vector<2x1x32xf32>,
    %c0_2 = arith.constant 0 : index
    %c17 = arith.constant 17 : index
    %c0_3 = arith.constant 0 : index
    %2 = vector.load %arg5[%c0_2, %c17, %c0_3] : memref<2x18x32xf32, #tpu.memory_space<vmem>>, vector<2x1x32xf32>
    tpu.vector_store %arg5[%c0_2, %c17, %c0_3], %0 {strides = array<i32>} : memref<2x18x32xf32, #tpu.memory_space<vmem>>, vector<2x1x32xf32>,
    %c0_4 = arith.constant 0 : index
    %c0_5 = arith.constant 0 : index
    %c0_6 = arith.constant 0 : index
    %3 = vector.load %arg1[%c0_4, %c0_5, %c0_6] : memref<2x16x32xf32, #tpu.memory_space<vmem>>, vector<2x16x32xf32>
    %c0_7 = arith.constant 0 : index
    %c1 = arith.constant 1 : index
    %c0_8 = arith.constant 0 : index
    %4 = vector.load %arg5[%c0_7, %c1, %c0_8] : memref<2x18x32xf32, #tpu.memory_space<vmem>>, vector<2x16x32xf32>
    tpu.vector_store %arg5[%c0_7, %c1, %c0_8], %3 {strides = array<i32>} : memref<2x18x32xf32, #tpu.memory_space<vmem>>, vector<2x16x32xf32>,
    %c0_9 = arith.constant 0 : index
    %c0_10 = arith.constant 0 : index
    %c0_11 = arith.constant 0 : index
    %5 = vector.load %arg5[%c0_9, %c0_10, %c0_11] : memref<2x18x32xf32, #tpu.memory_space<vmem>>, vector<2x16x32xf32>
    %6 = vector.shape_cast %5 : vector<2x16x32xf32> to vector<32x32xf32>
    %c0_12 = arith.constant 0 : index
    %c1_13 = arith.constant 1 : index
    %c0_14 = arith.constant 0 : index
    %7 = vector.load %arg5[%c0_12, %c1_13, %c0_14] : memref<2x18x32xf32, #tpu.memory_space<vmem>>, vector<2x16x32xf32>
    %8 = vector.shape_cast %7 : vector<2x16x32xf32> to vector<32x32xf32>
    %c0_15 = arith.constant 0 : index
    %c2 = arith.constant 2 : index
    %c0_16 = arith.constant 0 : index
    %9 = vector.load %arg5[%c0_15, %c2, %c0_16] : memref<2x18x32xf32, #tpu.memory_space<vmem>>, vector<2x16x32xf32>
    %10 = vector.shape_cast %9 : vector<2x16x32xf32> to vector<32x32xf32>
    %11 = tpu.concatenate %6, %8, %10 in 1 : vector<32x32xf32>, vector<32x32xf32>, vector<32x32xf32> -> vector<32x96xf32>
    %c0_17 = arith.constant 0 : index
    %c0_18 = arith.constant 0 : index
    %c0_19 = arith.constant 0 : index
    %12 = vector.load %arg2[%c0_17, %c0_18, %c0_19] : memref<2x96x32xf32, #tpu.memory_space<vmem>>, vector<1x96x32xf32>
    %13 = vector.shape_cast %12 : vector<1x96x32xf32> to vector<96x32xf32>
    %cst_20 = arith.constant dense<0.000000e+00> : vector<32x32xf32>
    %14 = tpu.matmul %11, %13, %cst_20 {dimension_numbers = #tpu.dot_dimension_numbers<[1], [0], [0], [1], [0, 0, 1, 1], [], []>} : vector<32x96xf32>, vector<96x32xf32>, vector<32x32xf32> -> vector<32x32xf32>
    %c0_21 = arith.constant 0 : index
    %c0_22 = arith.constant 0 : index
    %c0_23 = arith.constant 0 : index
    %15 = vector.load %arg3[%c0_21, %c0_22, %c0_23] : memref<2x1x32xf32, #tpu.memory_space<vmem>>, vector<1x1x32xf32>
    %16 = vector.shape_cast %15 : vector<1x1x32xf32> to vector<1x32xf32>
    %17 = vector.broadcast %16 : vector<1x32xf32> to vector<32x32xf32>
    %18 = arith.addf %14, %17 : vector<32x32xf32>
    %cst_24 = arith.constant 0.000000e+00 : f32
    %19 = vector.broadcast %cst_24 : f32 to vector<32x32xf32>
    %20 = arith.maximumf %18, %19 : vector<32x32xf32>
    %21 = vector.shape_cast %20 : vector<32x32xf32> to vector<2x16x32xf32>
    %c0_25 = arith.constant 0 : index
    %c1_26 = arith.constant 1 : index
    %c0_27 = arith.constant 0 : index
    %22 = vector.load %arg5[%c0_25, %c1_26, %c0_27] : memref<2x18x32xf32, #tpu.memory_space<vmem>>, vector<2x16x32xf32>
    tpu.vector_store %arg5[%c0_25, %c1_26, %c0_27], %21 {strides = array<i32>} : memref<2x18x32xf32, #tpu.memory_space<vmem>>, vector<2x16x32xf32>,
    %c0_28 = arith.constant 0 : index
    %c0_29 = arith.constant 0 : index
    %c0_30 = arith.constant 0 : index
    %23 = vector.load %arg5[%c0_28, %c0_29, %c0_30] : memref<2x18x32xf32, #tpu.memory_space<vmem>>, vector<2x16x32xf32>
    %24 = vector.shape_cast %23 : vector<2x16x32xf32> to vector<32x32xf32>
    %c0_31 = arith.constant 0 : index
    %c1_32 = arith.constant 1 : index
    %c0_33 = arith.constant 0 : index
    %25 = vector.load %arg5[%c0_31, %c1_32, %c0_33] : memref<2x18x32xf32, #tpu.memory_space<vmem>>, vector<2x16x32xf32>
    %26 = vector.shape_cast %25 : vector<2x16x32xf32> to vector<32x32xf32>
    %c0_34 = arith.constant 0 : index
    %c2_35 = arith.constant 2 : index
    %c0_36 = arith.constant 0 : index
    %27 = vector.load %arg5[%c0_34, %c2_35, %c0_36] : memref<2x18x32xf32, #tpu.memory_space<vmem>>, vector<2x16x32xf32>
    %28 = vector.shape_cast %27 : vector<2x16x32xf32> to vector<32x32xf32>
    %29 = tpu.concatenate %24, %26, %28 in 1 : vector<32x32xf32>, vector<32x32xf32>, vector<32x32xf32> -> vector<32x96xf32>
    %c1_37 = arith.constant 1 : index
    %c0_38 = arith.constant 0 : index
    %c0_39 = arith.constant 0 : index
    %30 = vector.load %arg2[%c1_37, %c0_38, %c0_39] : memref<2x96x32xf32, #tpu.memory_space<vmem>>, vector<1x96x32xf32>
    %31 = vector.shape_cast %30 : vector<1x96x32xf32> to vector<96x32xf32>
    %cst_40 = arith.constant dense<0.000000e+00> : vector<32x32xf32>
    %32 = tpu.matmul %29, %31, %cst_40 {dimension_numbers = #tpu.dot_dimension_numbers<[1], [0], [0], [1], [0, 0, 1, 1], [], []>} : vector<32x96xf32>, vector<96x32xf32>, vector<32x32xf32> -> vector<32x32xf32>
    %c1_41 = arith.constant 1 : index
    %c0_42 = arith.constant 0 : index
    %c0_43 = arith.constant 0 : index
    %33 = vector.load %arg3[%c1_41, %c0_42, %c0_43] : memref<2x1x32xf32, #tpu.memory_space<vmem>>, vector<1x1x32xf32>
    %34 = vector.shape_cast %33 : vector<1x1x32xf32> to vector<1x32xf32>
    %35 = vector.broadcast %34 : vector<1x32xf32> to vector<32x32xf32>
    %36 = arith.addf %32, %35 : vector<32x32xf32>
    %cst_44 = arith.constant 0.000000e+00 : f32
    %37 = vector.broadcast %cst_44 : f32 to vector<32x32xf32>
    %38 = arith.maximumf %36, %37 : vector<32x32xf32>
    %39 = vector.shape_cast %38 : vector<32x32xf32> to vector<2x16x32xf32>
    %c0_45 = arith.constant 0 : index
    %c0_46 = arith.constant 0 : index
    %c0_47 = arith.constant 0 : index
    %40 = vector.load %arg4[%c0_45, %c0_46, %c0_47] : memref<2x16x32xf32, #tpu.memory_space<vmem>>, vector<2x16x32xf32>
    tpu.vector_store %arg4[%c0_45, %c0_46, %c0_47], %39 {strides = array<i32>} : memref<2x16x32xf32, #tpu.memory_space<vmem>>, vector<2x16x32xf32>,
    return
  }
  func.func @transform_0(%arg0: i32) -> (i32, i32, i32) {
    %c0_i32 = arith.constant 0 : i32
    %c0_i32_0 = arith.constant 0 : i32
    %c0_i32_1 = arith.constant 0 : i32
    return %arg0, %c0_i32, %c0_i32_0 : i32, i32, i32
  }
  func.func @transform_1(%arg0: i32) -> (i32, i32, i32) {
    %c0_i32 = arith.constant 0 : i32
    %c0_i32_0 = arith.constant 0 : i32
    %c0_i32_1 = arith.constant 0 : i32
    %c0_i32_2 = arith.constant 0 : i32
    return %c0_i32, %c0_i32_0, %c0_i32_1 : i32, i32, i32
  }
  func.func @transform_2(%arg0: i32) -> (i32, i32, i32) {
    %c0_i32 = arith.constant 0 : i32
    %c0_i32_0 = arith.constant 0 : i32
    %c0_i32_1 = arith.constant 0 : i32
    %c0_i32_2 = arith.constant 0 : i32
    return %c0_i32, %c0_i32_0, %c0_i32_1 : i32, i32, i32
  }
  func.func @transform_3(%arg0: i32) -> (i32, i32, i32) {
    %c0_i32 = arith.constant 0 : i32
    %c0_i32_0 = arith.constant 0 : i32
    %c0_i32_1 = arith.constant 0 : i32
    return %arg0, %c0_i32, %c0_i32_0 : i32, i32, i32
  }
}

</mosaic_0001>

<llo_original>
// kernel: multilayer_cnn_forward.1
$region0: #{multilayer_cnn_forward.1}
  #allocation0 [shape = 'u32[]', space=smem, size = 0x4, offset = 0x4, fixed_abs, tag = 'smem constant byte address 0x4 - core index']
  #allocation1 [shape = 'u32[144,128]{1,0:T(1,128)}', space=vmem, size = 0x12000, scoped, tag = 'internal scratch']
  #allocation2 [shape = 'f32[2,18,32]{2,1,0:T(8,128)}', space=vmem, size = 0x6000, scoped, tag = 'scratch operand']
  %s0 = inlined_call_operand.vmem [shape: f32[2,16,32], index: 0, kind: input, shape index: {}]
  %s1 = inlined_call_operand.vmem [shape: f32[2,96,32], index: 1, kind: input, shape index: {}]
  %s2 = inlined_call_operand.vmem [shape: f32[2,1,32], index: 2, kind: input, shape index: {}]
  %s3 = inlined_call_operand.hbm [shape: f32[2,16,32], index: 3, kind: output, shape index: {}]
  %s4 = sld [smem:[#allocation0]]
  $region22: #{multilayer_cnn_forward.1} parent=0
    _
  %s6 = ssub.s32 1, %s4
  %s7 = scalar_select 0, %s6, %s4
  $region1: #{multilayer_cnn_forward.1} parent=0
    #allocation3 [shape = 'u8[16384]{0}', space=vmem, size = 0x4000, scoped, tag = 'output window, operand 0, single buffered']
    #allocation4 [shape = 's32[1]{0}', space=sflag, size = 0x4, scoped, tag = 'scoped memory for multilayer_cnn_forward.1']
    %8 = vsyncpa [#allocation4], 0
    // Predicated region
    $region2: #{multilayer_cnn_forward.1} parent=1 // pred_check
      _
    $region3: #{multilayer_cnn_forward.1} parent=1 // pred_check_branch
      %10 = sbr.rel (0) target = $region5
    $region4: #{multilayer_cnn_forward.1} parent=1 // pred_region
      _
    $region5: #{multilayer_cnn_forward.1} parent=1 // pred_fallthru
      _
    // Predicated region
    $region6: #{multilayer_cnn_forward.1} parent=1 // pred_check
      _
    $region7: #{multilayer_cnn_forward.1} parent=1 // pred_check_branch
      %12 = sbr.rel (0) target = $region9
    $region8: #{multilayer_cnn_forward.1} parent=1 // pred_region
      _
    $region9: #{multilayer_cnn_forward.1} parent=1 // pred_fallthru
      _
    // Predicated region
    $region10: #{multilayer_cnn_forward.1} parent=1 // pred_check
      _
    $region11: #{multilayer_cnn_forward.1} parent=1 // pred_check_branch
      %14 = sbr.rel (0) target = $region13
    $region12: #{multilayer_cnn_forward.1} parent=1 // pred_region
      _
    $region13: #{multilayer_cnn_forward.1} parent=1 // pred_fallthru
      _
    %vm15 = vcmask 253952
    %16 = vst.msk [vmem:[#allocation2] sm:$0x1] %vm15, 0.0
    %17 = vst.msk [vmem:[#allocation2 + $0x18] sm:$0x1] %vm15, 0.0
    %18 = vst.msk [vmem:[#allocation2 + $0x11] sm:$0x1] %vm15, 0.0
    %19 = vst.msk [vmem:[#allocation2 + $0x29] sm:$0x1] %vm15, 0.0
    %v20 = vld [vmem:[%s0] sm:$0xff]
    %v21 = vld [vmem:[%s0 + $0x8] sm:$0xff]
    %v22 = vld [vmem:[%s0 + $0x10] sm:$0xff]
    %v23 = vld [vmem:[%s0 + $0x18] sm:$0xff]
    %vm24 = vcmask 261120
    %25 = vst.msk [vmem:[#allocation2 + $0x1] sm:$0xff] %vm24, %v20
    %26 = vst.msk [vmem:[#allocation2 + $0x9] sm:$0xff] %vm24, %v21
    %27 = vst.msk [vmem:[#allocation2 + $0x19] sm:$0xff] %vm24, %v22
    %28 = vst.msk [vmem:[#allocation2 + $0x21] sm:$0xff] %vm24, %v23
    %v29 = vld [vmem:[#allocation2] sm:$0xff]
    %v30 = vld [vmem:[#allocation2 + $0x8] sm:$0xff]
    %v31 = vld [vmem:[#allocation2 + $0x18] sm:$0xff]
    %v32 = vld [vmem:[#allocation2 + $0x20] sm:$0xff]
    %v33 = vld [vmem:[#allocation2 + $0x1] sm:$0xff]
    %v34 = vld [vmem:[#allocation2 + $0x9] sm:$0xff]
    %v35 = vld [vmem:[#allocation2 + $0x19] sm:$0xff]
    %v36 = vld [vmem:[#allocation2 + $0x21] sm:$0xff]
    %v37 = vld [vmem:[#allocation2 + $0x2] sm:$0xff]
    %v38 = vld [vmem:[#allocation2 + $0xa] sm:$0xff]
    %v39 = vld [vmem:[#allocation2 + $0x1a] sm:$0xff]
    %v40 = vld [vmem:[#allocation2 + $0x22] sm:$0xff]
    %45 = vrot.lane.b32.xlu0 %v33, 32
    %v46 = vpop.permute.xlu0 %45
    %47 = vrot.lane.b32.xlu0 %v34, 32
    %v48 = vpop.permute.xlu0 %47
    %49 = vrot.lane.b32.xlu0 %v35, 32
    %v50 = vpop.permute.xlu0 %49
    %51 = vrot.lane.b32.xlu0 %v36, 32
    %v52 = vpop.permute.xlu0 %51
    %61 = vrot.lane.b32.xlu0 %v37, 64
    %v62 = vpop.permute.xlu0 %61
    %63 = vrot.lane.b32.xlu0 %v38, 64
    %v64 = vpop.permute.xlu0 %63
    %65 = vrot.lane.b32.xlu0 %v39, 64
    %v66 = vpop.permute.xlu0 %65
    %67 = vrot.lane.b32.xlu0 %v40, 64
    %v68 = vpop.permute.xlu0 %67
    %v73 = vsel %vm24, %v29, %v46
    %v74 = vsel %vm24, %v30, %v48
    %v75 = vsel %vm24, %v31, %v50
    %v76 = vsel %vm24, %v32, %v52
    %vm77 = vcmask 523264
    %v78 = vsel %vm77, %v73, %v62
    %v79 = vsel %vm77, %v74, %v64
    %v80 = vsel %vm77, %v75, %v66
    %v81 = vsel %vm77, %v76, %v68
    %v82 = vld [vmem:[%s1] sm:$0xff]
    %v83 = vld [vmem:[%s1 + $0x8] sm:$0xff]
    %v84 = vld [vmem:[%s1 + $0x10] sm:$0xff]
    %v85 = vld [vmem:[%s1 + $0x18] sm:$0xff]
    %v86 = vld [vmem:[%s1 + $0x20] sm:$0xff]
    %v87 = vld [vmem:[%s1 + $0x28] sm:$0xff]
    %v88 = vld [vmem:[%s1 + $0x30] sm:$0xff]
    %v89 = vld [vmem:[%s1 + $0x38] sm:$0xff]
    %v90 = vld [vmem:[%s1 + $0x40] sm:$0xff]
    %v91 = vld [vmem:[%s1 + $0x48] sm:$0xff]
    %v92 = vld [vmem:[%s1 + $0x50] sm:$0xff]
    %v93 = vld [vmem:[%s1 + $0x58] sm:$0xff]
    %v94 = vld [vmem:[%s2] sm:$0x1]
    %v96 = vlaneseq
    %v97 = vshrl.u32 %v96, 7
    %v98 = vsub.s32 0, %v97
    %v99 = vrot.slane %v94, %v98
    %vm101 = vcmask 785408
    %v103 = vsel %vm101, %v78, 0
    %v106 = vsel %vm101, %v79, 0
    %v109 = vsel %vm101, %v80, 0
    %v112 = vsel %vm101, %v81, 0
    %114 = vmatprep.subr.mxu0 0.0
    %115 = vmatpush1.msra.mxu0 %v82
    %116 = vmatprep.subr.mxu0 0.0
    %117 = vmatpush1.msra.mxu0 %v83
    %118 = vmatprep.subr.mxu0 0.0
    %119 = vmatpush1.msra.mxu0 %v84
    %120 = vmatprep.subr.mxu0 0.0
    %121 = vmatpush1.msra.mxu0 %v85
    %122 = vmatprep.subr.mxu0 0.0
    %123 = vmatpush1.msra.mxu0 %v86
    %124 = vmatprep.subr.mxu0 0.0
    %125 = vmatpush1.msra.mxu0 %v87
    %126 = vmatprep.subr.mxu0 0.0
    %127 = vmatpush1.msra.mxu0 %v88
    %128 = vmatprep.subr.mxu0 0.0
    %129 = vmatpush1.msra.mxu0 %v89
    %130 = vmatprep.subr.mxu0 0.0
    %131 = vmatpush1.msra.mxu0 %v90
    %132 = vmatprep.subr.mxu0 0.0
    %133 = vmatpush1.msra.mxu0 %v91
    %134 = vmatprep.subr.mxu0 0.0
    %135 = vmatpush1.msra.mxu0 %v92
    %136 = vmatprep.subr.mxu0 0.0
    %137 = vmatpush1.msra.mxu0 %v93
    %138 = vmatprep.subr.mxu0 0.0
    %139 = vmatpush1.msra.mxu0 0.0
    %140 = vmatprep.subr.mxu0 0.0
    %141 = vmatpush1.msra.mxu0 0.0
    %142 = vmatprep.subr.mxu0 0.0
    %143 = vmatpush1.msra.mxu0 0.0
    %144 = vmatprep.subr.mxu0 0.0
    %145 = vmatpush1.msra.mxu0 0.0
    %146 = vmatprep.subr.mxu0 0.0
    %147 = vmatpush1.msra.mxu0 0.0
    %148 = vmatprep.subr.mxu0 0.0
    %149 = vmatpush1.msra.mxu0 0.0
    %150 = vmatprep.subr.mxu0 0.0
    %151 = vmatpush1.msra.mxu0 0.0
    %152 = vmatprep.subr.mxu0 0.0
    %153 = vmatpush1.msra.mxu0 0.0
    %154 = vmatprep.subr.mxu0 0.0
    %155 = vmatpush1.msra.mxu0 0.0
    %156 = vmatprep.subr.mxu0 0.0
    %157 = vmatpush1.msra.mxu0 0.0
    %158 = vmatprep.subr.mxu0 0.0
    %159 = vmatpush1.msra.mxu0 0.0
    %160 = vmatprep.subr.mxu0 0.0
    %161 = vmatpush1.msra.mxu0 0.0
    %162 = vmatprep.subr.mxu0 0.0
    %163 = vmatpush1.msra.mxu0 0.0
    %164 = vmatprep.subr.mxu0 0.0
    %165 = vmatpush1.msra.mxu0 0.0
    %166 = vmatprep.subr.mxu0 0.0
    %167 = vmatpush1.msra.mxu0 0.0
    %168 = vmatprep.subr.mxu0 0.0
    %169 = vmatpush1.msra.mxu0 0.0
    %170 = vmatprep.subr.mxu0 0.0
    %171 = vmatpush1.msra.mxu0 0.0
    %172 = vmatprep.subr.mxu0 0.0
    %173 = vmatpush1.msra.mxu0 0.0
    %174 = vmatprep.subr.mxu0 0.0
    %175 = vmatpush1.msra.mxu0 0.0
    %176 = vmatprep.subr.mxu0 0.0
    %177 = vmatpush1.msra.mxu0 0.0
    %178 = vmatprep.mubr.f32.mxu0 0.0
    %179 = vmatmul.mubr.f32.gmra.mrb[0].mxu0 %v103
    %v180 = vpop.f32.mrb[0].mxu0
    %v181 = vadd.f32 %v99, %v180
    %v182 = vpop.f32.mrb[0].mxu0
    %183 = vmatprep.mubr.f32.mxu0 0.0
    %184 = vmatmul.mubr.f32.gmra.mrb[0].mxu0 %v106
    %v185 = vpop.f32.mrb[0].mxu0
    %v186 = vadd.f32 %v99, %v185
    %v187 = vpop.f32.mrb[0].mxu0
    %188 = vmatprep.mubr.f32.mxu0 0.0
    %189 = vmatmul.mubr.f32.gmra.mrb[0].mxu0 %v109
    %v190 = vpop.f32.mrb[0].mxu0
    %v191 = vadd.f32 %v99, %v190
    %v192 = vpop.f32.mrb[0].mxu0
    %193 = vmatprep.mubr.f32.mxu0 0.0
    %194 = vmatmul.mubr.f32.gmra.mrb[0].mxu0 %v112
    %v195 = vpop.f32.mrb[0].mxu0
    %v196 = vadd.f32 %v99, %v195
    %v197 = vpop.f32.mrb[0].mxu0
    %198 = vdwg.mxu0
    %v199 = vmax.f32 %v181, 0.0
    %v200 = vmax.f32 %v186, 0.0
    %v201 = vmax.f32 %v191, 0.0
    %v202 = vmax.f32 %v196, 0.0
    %203 = vst.msk [vmem:[#allocation2 + $0x1] sm:$0xff] %vm24, %v199
    %204 = vst.msk [vmem:[#allocation2 + $0x9] sm:$0xff] %vm24, %v200
    %205 = vst.msk [vmem:[#allocation2 + $0x19] sm:$0xff] %vm24, %v201
    %206 = vst.msk [vmem:[#allocation2 + $0x21] sm:$0xff] %vm24, %v202
    %v207 = vld [vmem:[#allocation2] sm:$0xff]
    %v208 = vld [vmem:[#allocation2 + $0x8] sm:$0xff]
    %v209 = vld [vmem:[#allocation2 + $0x18] sm:$0xff]
    %v210 = vld [vmem:[#allocation2 + $0x20] sm:$0xff]
    %v211 = vld [vmem:[#allocation2 + $0x1] sm:$0xff]
    %v212 = vld [vmem:[#allocation2 + $0x9] sm:$0xff]
    %v213 = vld [vmem:[#allocation2 + $0x19] sm:$0xff]
    %v214 = vld [vmem:[#allocation2 + $0x21] sm:$0xff]
    %v215 = vld [vmem:[#allocation2 + $0x2] sm:$0xff]
    %v216 = vld [vmem:[#allocation2 + $0xa] sm:$0xff]
    %v217 = vld [vmem:[#allocation2 + $0x1a] sm:$0xff]
    %v218 = vld [vmem:[#allocation2 + $0x22] sm:$0xff]
    %223 = vrot.lane.b32.xlu0 %v211, 32
    %v224 = vpop.permute.xlu0 %223
    %225 = vrot.lane.b32.xlu0 %v212, 32
    %v226 = vpop.permute.xlu0 %225
    %227 = vrot.lane.b32.xlu0 %v213, 32
    %v228 = vpop.permute.xlu0 %227
    %229 = vrot.lane.b32.xlu0 %v214, 32
    %v230 = vpop.permute.xlu0 %229
    %239 = vrot.lane.b32.xlu0 %v215, 64
    %v240 = vpop.permute.xlu0 %239
    %241 = vrot.lane.b32.xlu0 %v216, 64
    %v242 = vpop.permute.xlu0 %241
    %243 = vrot.lane.b32.xlu0 %v217, 64
    %v244 = vpop.permute.xlu0 %243
    %245 = vrot.lane.b32.xlu0 %v218, 64
    %v246 = vpop.permute.xlu0 %245
    %v251 = vsel %vm24, %v207, %v224
    %v252 = vsel %vm24, %v208, %v226
    %v253 = vsel %vm24, %v209, %v228
    %v254 = vsel %vm24, %v210, %v230
    %v255 = vsel %vm77, %v251, %v240
    %v256 = vsel %vm77, %v252, %v242
    %v257 = vsel %vm77, %v253, %v244
    %v258 = vsel %vm77, %v254, %v246
    %s259 = scalar_lea.vmem %s1, 96
    %v260 = vld [vmem:[%s259] sm:$0xff]
    %v261 = vld [vmem:[%s259 + $0x8] sm:$0xff]
    %v262 = vld [vmem:[%s259 + $0x10] sm:$0xff]
    %v263 = vld [vmem:[%s259 + $0x18] sm:$0xff]
    %v264 = vld [vmem:[%s259 + $0x20] sm:$0xff]
    %v265 = vld [vmem:[%s259 + $0x28] sm:$0xff]
    %v266 = vld [vmem:[%s259 + $0x30] sm:$0xff]
    %v267 = vld [vmem:[%s259 + $0x38] sm:$0xff]
    %v268 = vld [vmem:[%s259 + $0x40] sm:$0xff]
    %v269 = vld [vmem:[%s259 + $0x48] sm:$0xff]
    %v270 = vld [vmem:[%s259 + $0x50] sm:$0xff]
    %v271 = vld [vmem:[%s259 + $0x58] sm:$0xff]
    %s272 = scalar_lea.vmem %s2, 1
    %v273 = vld [vmem:[%s272] sm:$0x1]
    %v275 = vlaneseq
    %v276 = vshrl.u32 %v275, 7
    %v277 = vsub.s32 0, %v276
    %v278 = vrot.slane %v273, %v277
    %v281 = vsel %vm101, %v255, 0
    %v284 = vsel %vm101, %v256, 0
    %v287 = vsel %vm101, %v257, 0
    %v290 = vsel %vm101, %v258, 0
    %292 = vmatprep.subr.mxu0 0.0
    %293 = vmatpush1.msra.mxu0 %v260
    %294 = vmatprep.subr.mxu0 0.0
    %295 = vmatpush1.msra.mxu0 %v261
    %296 = vmatprep.subr.mxu0 0.0
    %297 = vmatpush1.msra.mxu0 %v262
    %298 = vmatprep.subr.mxu0 0.0
    %299 = vmatpush1.msra.mxu0 %v263
    %300 = vmatprep.subr.mxu0 0.0
    %301 = vmatpush1.msra.mxu0 %v264
    %302 = vmatprep.subr.mxu0 0.0
    %303 = vmatpush1.msra.mxu0 %v265
    %304 = vmatprep.subr.mxu0 0.0
    %305 = vmatpush1.msra.mxu0 %v266
    %306 = vmatprep.subr.mxu0 0.0
    %307 = vmatpush1.msra.mxu0 %v267
    %308 = vmatprep.subr.mxu0 0.0
    %309 = vmatpush1.msra.mxu0 %v268
    %310 = vmatprep.subr.mxu0 0.0
    %311 = vmatpush1.msra.mxu0 %v269
    %312 = vmatprep.subr.mxu0 0.0
    %313 = vmatpush1.msra.mxu0 %v270
    %314 = vmatprep.subr.mxu0 0.0
    %315 = vmatpush1.msra.mxu0 %v271
    %316 = vmatprep.subr.mxu0 0.0
    %317 = vmatpush1.msra.mxu0 0.0
    %318 = vmatprep.subr.mxu0 0.0
    %319 = vmatpush1.msra.mxu0 0.0
    %320 = vmatprep.subr.mxu0 0.0
    %321 = vmatpush1.msra.mxu0 0.0
    %322 = vmatprep.subr.mxu0 0.0
    %323 = vmatpush1.msra.mxu0 0.0
    %324 = vmatprep.subr.mxu0 0.0
    %325 = vmatpush1.msra.mxu0 0.0
    %326 = vmatprep.subr.mxu0 0.0
    %327 = vmatpush1.msra.mxu0 0.0
    %328 = vmatprep.subr.mxu0 0.0
    %329 = vmatpush1.msra.mxu0 0.0
    %330 = vmatprep.subr.mxu0 0.0
    %331 = vmatpush1.msra.mxu0 0.0
    %332 = vmatprep.subr.mxu0 0.0
    %333 = vmatpush1.msra.mxu0 0.0
    %334 = vmatprep.subr.mxu0 0.0
    %335 = vmatpush1.msra.mxu0 0.0
    %336 = vmatprep.subr.mxu0 0.0
    %337 = vmatpush1.msra.mxu0 0.0
    %338 = vmatprep.subr.mxu0 0.0
    %339 = vmatpush1.msra.mxu0 0.0
    %340 = vmatprep.subr.mxu0 0.0
    %341 = vmatpush1.msra.mxu0 0.0
    %342 = vmatprep.subr.mxu0 0.0
    %343 = vmatpush1.msra.mxu0 0.0
    %344 = vmatprep.subr.mxu0 0.0
    %345 = vmatpush1.msra.mxu0 0.0
    %346 = vmatprep.subr.mxu0 0.0
    %347 = vmatpush1.msra.mxu0 0.0
    %348 = vmatprep.subr.mxu0 0.0
    %349 = vmatpush1.msra.mxu0 0.0
    %350 = vmatprep.subr.mxu0 0.0
    %351 = vmatpush1.msra.mxu0 0.0
    %352 = vmatprep.subr.mxu0 0.0
    %353 = vmatpush1.msra.mxu0 0.0
    %354 = vmatprep.subr.mxu0 0.0
    %355 = vmatpush1.msra.mxu0 0.0
    %356 = vmatprep.mubr.f32.mxu0 0.0
    %357 = vmatmul.mubr.f32.gmra.mrb[0].mxu0 %v281
    %v358 = vpop.f32.mrb[0].mxu0
    %v359 = vadd.f32 %v278, %v358
    %v360 = vpop.f32.mrb[0].mxu0
    %361 = vmatprep.mubr.f32.mxu0 0.0
    %362 = vmatmul.mubr.f32.gmra.mrb[0].mxu0 %v284
    %v363 = vpop.f32.mrb[0].mxu0
    %v364 = vadd.f32 %v278, %v363
    %v365 = vpop.f32.mrb[0].mxu0
    %366 = vmatprep.mubr.f32.mxu0 0.0
    %367 = vmatmul.mubr.f32.gmra.mrb[0].mxu0 %v287
    %v368 = vpop.f32.mrb[0].mxu0
    %v369 = vadd.f32 %v278, %v368
    %v370 = vpop.f32.mrb[0].mxu0
    %371 = vmatprep.mubr.f32.mxu0 0.0
    %372 = vmatmul.mubr.f32.gmra.mrb[0].mxu0 %v290
    %v373 = vpop.f32.mrb[0].mxu0
    %v374 = vadd.f32 %v278, %v373
    %v375 = vpop.f32.mrb[0].mxu0
    %376 = vdwg.mxu0
    %v377 = vmax.f32 %v359, 0.0
    %v378 = vmax.f32 %v364, 0.0
    %v379 = vmax.f32 %v369, 0.0
    %v380 = vmax.f32 %v374, 0.0
    %381 = vst.msk [vmem:[#allocation3] sm:$0xff] %vm24, %v377
    %382 = vst.msk [vmem:[#allocation3 + $0x8] sm:$0xff] %vm24, %v378
    %383 = vst.msk [vmem:[#allocation3 + $0x10] sm:$0xff] %vm24, %v379
    %384 = vst.msk [vmem:[#allocation3 + $0x18] sm:$0xff] %vm24, %v380
    // Predicated region
    $region14: #{multilayer_cnn_forward.1} parent=1 // pred_check
      _
    $region15: #{multilayer_cnn_forward.1} parent=1 // pred_check_branch
      %386 = sbr.rel (0) target = $region17
    $region16: #{multilayer_cnn_forward.1} parent=1 // pred_region
      %s388 = ssub.s32 512, 512
      %389 = vsyncadd [#allocation4], %s388
      %s390 = sshll.u32 [#allocation3], 4
      %s391 = int_to_ptr.vmem [resolvable:$true] %s390
      %396 = dma.vmem_to_hbm [thread:$0]  %s391, 512, %s3, [#allocation4], 128, 128, 8
    $region17: #{multilayer_cnn_forward.1} parent=1 // pred_fallthru
      _
    // Predicated region
    $region18: #{multilayer_cnn_forward.1} parent=1 // pred_check
      _
    $region19: #{multilayer_cnn_forward.1} parent=1 // pred_check_branch
      %398 = sbr.rel (0) target = $region21
    $region20: #{multilayer_cnn_forward.1} parent=1 // pred_region
      %399 = dma.done [#allocation4], 512
    $region21: #{multilayer_cnn_forward.1} parent=1 // pred_fallthru
      _
    %400 = vsyncpa [#allocation4], 1

</llo_original>
